<compile_context>
chip_gen: v5e
topology: v5e:2x2
jax: 0.10.0
libtpu: 0.0.40
codegen_flags: <defaults>
</compile_context>

<pallas_src>
import functools
import math

import jax
import jax.numpy as jnp
from jax.experimental import pallas as pl
from jax.experimental.pallas import tpu as pltpu


# ----------------------------- Pallas kernels ------------------------------- #

def _morph_softmax_kernel(x_ref, ew_ref, a_ref, o_ref, *,
                          sign_x, sign_out, beta, mxu_dtype):
    # x_ref : (1, K, TL)  im2col patches (raw x)
    # ew_ref: (O, K)      exp(beta*w - a), precomputed once in the wrapper
    # a_ref : (O, 1)      per-row max of beta*w
    # o_ref : (1, O, TL)
    xb = x_ref[0].astype(jnp.float32) * jnp.float32(sign_x * beta)   # (K, TL)
    c = jnp.max(xb, axis=0, keepdims=True)                           # (1, TL)
    ex = jnp.exp(xb - c)                                             # (K, TL) -- K*TL exps only
    # MXU contraction over K; f32 accumulation.
    s = jnp.dot(ew_ref[...], ex.astype(mxu_dtype),
                preferred_element_type=jnp.float32)                  # (O, TL)
    r = (jnp.log(s) + a_ref[...] + c) * jnp.float32(1.0 / beta)      # (O, TL)
    if sign_out < 0:
        r = -r
    o_ref[0] = r.astype(o_ref.dtype)


def _morph_hardmax_kernel(x_ref, w_ref, o_ref, *, sign_x, sign_out):
    # x_ref: (1, K, TL)   w_ref: (O, K, 1)   o_ref: (1, O, TL)
    x = x_ref[0].astype(jnp.float32)                                 # (K, TL)
    xs = x if sign_x > 0 else -x
    K = w_ref.shape[1]
    CH = 8                                                            # one sublane group
    acc = None
    for c0 in range(0, K, CH):                                        # static unroll
        c1 = min(c0 + CH, K)
        z = w_ref[:, c0:c1, :] + xs[None, c0:c1, :]                   # (O, cs, TL)
        zmax = jnp.max(z, axis=1)                                     # (O, TL)
        acc = zmax if acc is None else jnp.maximum(acc, zmax)
    if sign_out < 0:
        acc = -acc
    o_ref[0] = acc.astype(o_ref.dtype)


# ------------------------------ JAX wrapper --------------------------------- #

def _unfold_same(x, kernel_size):
    """fixed_padding + nn.Unfold(kernel_size, stride=1) -> (B, C*k*k, H*W)."""
    B, C, H, W = x.shape
    k = kernel_size
    pad_total = k - 1
    pb = pad_total // 2
    pe = pad_total - pb
    xp = jnp.pad(x, ((0, 0), (0, 0), (pb, pe), (pb, pe)))
    # torch.nn.Unfold ordering: channel-major, then (kh, kw); spatial row-major.
    patches = [xp[:, :, i:i + H, j:j + W] for i in range(k) for j in range(k)]
    xu = jnp.stack(patches, axis=2)                  # (B, C, k*k, H, W)
    return xu.reshape(B, C * k * k, H * W)           # (B, K, L)


def _pick_lane_tile(L, K, O, lane_tile, vmem_budget_bytes=24 * 1024 * 1024):
    """Lane tile: multiple of 128, capped so double-buffered blocks fit a
    conservative VMEM budget that also holds on v7x (64 MiB phys / 32 MiB scoped)."""
    per_lane = 4 * 2 * (K + O)                        # f32, double-buffered in+out
    cap = max(128, (vmem_budget_bytes // per_lane) // 128 * 128)
    lpad128 = -(-L // 128) * 128
    tl = min(int(lane_tile), cap, lpad128)
    tl = max(128, (tl // 128) * 128)
    lpad = -(-L // tl) * tl
    return tl, lpad


def morphology_pallas(x, weight, *, kernel_size=5, op_type="erosion2d",
                      soft_max=True, beta=15.0, lane_tile=2048, mxu_dtype=None):
    """x: (B, C, H, W) NCHW.  weight: (O, C, k, k).  returns (B, O, H, W)."""
    if op_type not in ("erosion2d", "dilation2d"):
        raise ValueError(op_type)
    B, C, H, W = x.shape
    O = weight.shape[0]
    k = kernel_size
    K = C * k * k
    L = H * W
    L_sqrt = int(math.sqrt(L))
    assert L_sqrt * L_sqrt == L, "module assumes a square spatial output"

    sign_x = -1.0 if op_type == "erosion2d" else 1.0
    sign_out = -1.0 if op_type == "erosion2d" else 1.0

    # Wrapper-side layout glue: fixed padding + unfold (im2col), lane padding.
    xu = _unfold_same(x, k)                           # (B, K, L)
    TL, Lpad = _pick_lane_tile(L, K, O, lane_tile)
    if Lpad != L:
        xu = jnp.pad(xu, ((0, 0), (0, 0), (0, Lpad - L)))
    grid = (B, Lpad // TL)

    wf = weight.reshape(O, K).astype(jnp.float32)

    cparams = pltpu.CompilerParams(
        dimension_semantics=("parallel", "parallel"))

    if soft_max:
        if mxu_dtype is None:
            mxu_dtype = x.dtype
        # Hoisted weight preprocessing: computed once, not per grid step.
        wb = wf * jnp.float32(beta)                       # (O, K)
        a = jnp.max(wb, axis=1, keepdims=True)            # (O, 1), f32
        ew = jnp.exp(wb - a).astype(mxu_dtype)            # (O, K), MXU lhs
        kernel = functools.partial(
            _morph_softmax_kernel, sign_x=sign_x, sign_out=sign_out,
            beta=float(beta), mxu_dtype=mxu_dtype)
        out = pl.pallas_call(
            kernel,
            out_shape=jax.ShapeDtypeStruct((B, O, Lpad), x.dtype),
            grid_spec=pltpu.PrefetchScalarGridSpec(
                num_scalar_prefetch=0,
                grid=grid,
                in_specs=[
                    pl.BlockSpec((1, K, TL), lambda b, l: (b, 0, l)),
                    pl.BlockSpec((O, K), lambda b, l: (0, 0)),
                    pl.BlockSpec((O, 1), lambda b, l: (0, 0)),
                ],
                out_specs=pl.BlockSpec((1, O, TL), lambda b, l: (b, 0, l)),
            ),
            compiler_params=cparams,
        )(xu, ew, a)
    else:
        w3 = wf[:, :, None]                               # (O, K, 1): K on sublanes
        kernel = functools.partial(
            _morph_hardmax_kernel, sign_x=sign_x, sign_out=sign_out)
        out = pl.pallas_call(
            kernel,
            out_shape=jax.ShapeDtypeStruct((B, O, Lpad), x.dtype),
            grid_spec=pltpu.PrefetchScalarGridSpec(
                num_scalar_prefetch=0,
                grid=grid,
                in_specs=[
                    pl.BlockSpec((1, K, TL), lambda b, l: (b, 0, l)),
                    pl.BlockSpec((O, K, 1), lambda b, l: (0, 0, 0)),
                ],
                out_specs=pl.BlockSpec((1, O, TL), lambda b, l: (b, 0, l)),
            ),
            compiler_params=cparams,
        )(xu, w3)

    out = out[:, :, :L]
    # mirrors torch: x.view(-1, out_channels, L_sqrt, L_sqrt)
    return out.reshape(-1, O, L_sqrt, L_sqrt)


# ----------------------------- pure-JAX reference ---------------------------- #

def morphology_ref(x, weight, *, kernel_size=5, op_type="erosion2d",
                   soft_max=True, beta=15.0):
    B, C, H, W = x.shape
    O = weight.shape[0]
    k = kernel_size
    xu = _unfold_same(x, k)[:, None, :, :]                  # (B, 1, K, L)
    w = weight.reshape(O, C * k * k)[None, :, :, None]      # (1, O, K, 1)
    if op_type == "erosion2d":
        z = w - xu
    elif op_type == "dilation2d":
        z = w + xu
    else:
        raise ValueError(op_type)
    if soft_max:
        r = jax.nn.logsumexp(z * beta, axis=2) / beta
    else:
        r = jnp.max(z, axis=2)
    if op_type == "erosion2d":
        r = -r
    L_sqrt = int(math.sqrt(H * W))
    return r.reshape(-1, O, L_sqrt, L_sqrt)


# ---------------------------------- main ------------------------------------- #

if __name__ == "__main__":
    B, C, H, W = 2, 4, 16, 16
    O, k, beta = 8, 5, 15.0

    key = jax.random.PRNGKey(0)
    kx, kw = jax.random.split(key)
    x = jax.random.normal(kx, (B, C, H, W), dtype=jnp.float32)
    # Module __init__ uses zeros; use a small random init so the math is exercised.
    weight = 0.1 * jax.random.normal(kw, (O, C, k, k), dtype=jnp.float32)

    ok = True
    for op_type in ("erosion2d", "dilation2d"):
        for soft_max in (True, False):
            out = morphology_pallas(x, weight, kernel_size=k, op_type=op_type,
                                    soft_max=soft_max, beta=beta)
            out = jax.block_until_ready(out)
            ref = morphology_ref(x, weight, kernel_size=k, op_type=op_type,
                                 soft_max=soft_max, beta=beta)
            assert out.shape == (B, O, H, W)
            # hard-max is exact; soft-max uses a separable logsumexp shift + MXU
            # contraction, so allow a slightly looser (still tight) tolerance.
            atol = 1e-4 if not soft_max else 2e-3
            rtol = 1e-4 if not soft_max else 2e-3
            if not jnp.allclose(out, ref, atol=atol, rtol=rtol):
                ok = False
                print("mismatch op=%s soft_max=%s maxdiff=%e" %
                      (op_type, soft_max, float(jnp.max(jnp.abs(out - ref)))))

        # bf16 MXU operands (v6e/v7x recipe); epilogue stays f32.
        out_bf = morphology_pallas(x, weight, kernel_size=k, op_type=op_type,
                                   soft_max=True, beta=beta,
                                   mxu_dtype=jnp.bfloat16)
        out_bf = jax.block_until_ready(out_bf)
        ref = morphology_ref(x, weight, kernel_size=k, op_type=op_type,
                             soft_max=True, beta=beta)
        if not jnp.allclose(out_bf, ref, atol=5e-2, rtol=5e-2):
            ok = False
            print("bf16 mismatch op=%s maxdiff=%e" %
                  (op_type, float(jnp.max(jnp.abs(out_bf - ref)))))

    if ok:
        print("KERNEL_OK")
</pallas_src>

<mosaic_0001>
module attributes {stable_mosaic.version = 11 : i64} {
  func.func @_morph_softmax_kernel(%arg0: i32, %arg1: i32, %arg2: memref<1x100x256xf32, #tpu.memory_space<vmem>>, %arg3: memref<8x100xf32, #tpu.memory_space<vmem>>, %arg4: memref<8x1xf32, #tpu.memory_space<vmem>>, %arg5: memref<1x8x256xf32, #tpu.memory_space<vmem>>) attributes {dimension_semantics = [#tpu.dimension_semantics<parallel>, #tpu.dimension_semantics<parallel>], iteration_bounds = array<i64: 2, 1>, scalar_prefetch = 0 : i64, scratch_operands = 0 : i64, tpu.core_type = #tpu.core_type<tc>, window_params = [{transform_indices = @transform_0, window_bounds = array<i64: 1, 100, 256>}, {pipeline_mode = #tpu.pipeline_mode<synchronous>, transform_indices = @transform_1, window_bounds = array<i64: 8, 100>}, {pipeline_mode = #tpu.pipeline_mode<synchronous>, transform_indices = @transform_2, window_bounds = array<i64: 8, 1>}, {transform_indices = @transform_3, window_bounds = array<i64: 1, 8, 256>}]} {
    %c0 = arith.constant 0 : index
    %c0_0 = arith.constant 0 : index
    %c0_1 = arith.constant 0 : index
    %0 = vector.load %arg2[%c0, %c0_0, %c0_1] : memref<1x100x256xf32, #tpu.memory_space<vmem>>, vector<1x100x256xf32>
    %1 = vector.shape_cast %0 : vector<1x100x256xf32> to vector<100x256xf32>
    %cst = arith.constant -1.500000e+01 : f32
    %2 = vector.broadcast %cst : f32 to vector<100x256xf32>
    %3 = arith.mulf %1, %2 : vector<100x256xf32>
    %cst_2 = arith.constant dense<0xFF800000> : vector<256xf32>
    %4 = vector.multi_reduction <maximumf>, %3, %cst_2 [0] : vector<100x256xf32> to vector<256xf32>
    %5 = vector.shape_cast %4 : vector<256xf32> to vector<1x256xf32>
    %6 = vector.broadcast %5 : vector<1x256xf32> to vector<100x256xf32>
    %7 = arith.subf %3, %6 : vector<100x256xf32>
    %8 = math.exp %7 : vector<100x256xf32>
    %c0_3 = arith.constant 0 : index
    %c0_4 = arith.constant 0 : index
    %9 = vector.load %arg3[%c0_3, %c0_4] : memref<8x100xf32, #tpu.memory_space<vmem>>, vector<8x100xf32>
    %cst_5 = arith.constant dense<0.000000e+00> : vector<8x256xf32>
    %10 = tpu.matmul %9, %8, %cst_5 {dimension_numbers = #tpu.dot_dimension_numbers<[1], [0], [0], [1], [0, 0, 1, 1], [], []>} : vector<8x100xf32>, vector<100x256xf32>, vector<8x256xf32> -> vector<8x256xf32>
    %11 = math.log %10 : vector<8x256xf32>
    %c0_6 = arith.constant 0 : index
    %c0_7 = arith.constant 0 : index
    %12 = vector.load %arg4[%c0_6, %c0_7] : memref<8x1xf32, #tpu.memory_space<vmem>>, vector<8x1xf32>
    %13 = vector.broadcast %12 : vector<8x1xf32> to vector<8x256xf32>
    %14 = arith.addf %11, %13 : vector<8x256xf32>
    %15 = vector.broadcast %5 : vector<1x256xf32> to vector<8x256xf32>
    %16 = arith.addf %14, %15 : vector<8x256xf32>
    %cst_8 = arith.constant 0.0666666701 : f32
    %17 = vector.broadcast %cst_8 : f32 to vector<8x256xf32>
    %18 = arith.mulf %16, %17 : vector<8x256xf32>
    %cst_9 = arith.constant 0.000000e+00 : f32
    %19 = vector.broadcast %cst_9 : f32 to vector<8x256xf32>
    %20 = arith.subf %19, %18 : vector<8x256xf32>
    %c0_10 = arith.constant 0 : index
    %c0_11 = arith.constant 0 : index
    %c0_12 = arith.constant 0 : index
    %21 = vector.load %arg5[%c0_10, %c0_11, %c0_12] : memref<1x8x256xf32, #tpu.memory_space<vmem>>, vector<1x8x256xf32>
    %22 = vector.shape_cast %21 : vector<1x8x256xf32> to vector<8x256xf32>
    %23 = vector.shape_cast %20 : vector<8x256xf32> to vector<1x8x256xf32>
    tpu.vector_store %arg5[%c0_10, %c0_11, %c0_12], %23 {strides = array<i32>} : memref<1x8x256xf32, #tpu.memory_space<vmem>>, vector<1x8x256xf32>,
    return
  }
  func.func @transform_0(%arg0: i32, %arg1: i32) -> (i32, i32, i32) {
    %c0_i32 = arith.constant 0 : i32
    %c0_i32_0 = arith.constant 0 : i32
    return %arg0, %c0_i32, %arg1 : i32, i32, i32
  }
  func.func @transform_1(%arg0: i32, %arg1: i32) -> (i32, i32) {
    %c0_i32 = arith.constant 0 : i32
    %c0_i32_0 = arith.constant 0 : i32
    %c0_i32_1 = arith.constant 0 : i32
    return %c0_i32, %c0_i32_0 : i32, i32
  }
  func.func @transform_2(%arg0: i32, %arg1: i32) -> (i32, i32) {
    %c0_i32 = arith.constant 0 : i32
    %c0_i32_0 = arith.constant 0 : i32
    %c0_i32_1 = arith.constant 0 : i32
    return %c0_i32, %c0_i32_0 : i32, i32
  }
  func.func @transform_3(%arg0: i32, %arg1: i32) -> (i32, i32, i32) {
    %c0_i32 = arith.constant 0 : i32
    %c0_i32_0 = arith.constant 0 : i32
    return %arg0, %c0_i32, %arg1 : i32, i32, i32
  }
}

</mosaic_0001>

<llo_original>
// kernel: tpu_custom_call.1
$region0: #{tpu_custom_call.1}
  #allocation0 [shape = 'u32[]', space=smem, size = 0x4, offset = 0x4, fixed_abs, tag = 'smem constant byte address 0x4 - core index']
  #allocation1 [shape = 'u32[72,128]{1,0:T(1,128)}', space=vmem, size = 0x9000, scoped, tag = 'internal scratch']
  %s0 = inlined_call_operand.vmem [shape: f32[2,100,256], index: 0, kind: input, shape index: {}]
  %s1 = inlined_call_operand.vmem [shape: f32[8,100], index: 1, kind: input, shape index: {}]
  %s2 = inlined_call_operand.vmem [shape: f32[8,1], index: 2, kind: input, shape index: {}]
  %s3 = inlined_call_operand.hbm [shape: f32[2,8,256], index: 3, kind: output, shape index: {}]
  %s4 = sld [smem:[#allocation0]]
  $region45: #{tpu_custom_call.1} parent=0
    _
  %s6 = ssub.s32 1, %s4
  %s7 = scalar_select 0, %s6, %s4
  $region1: #{tpu_custom_call.1} parent=0
    #allocation2 [shape = 'u8[16384]{0}', space=vmem, size = 0x4000, scoped, tag = 'output window, operand 0']
    #allocation3 [shape = 's32[2]{0}', space=sflag, size = 0x8, scoped, tag = 'scoped memory for tpu_custom_call.1']
    %8 = vsyncpa [#allocation3], 0
    %s9 = scalar_lea.sflag [#allocation3], 1
    %10 = vsyncpa %s9, 0
    loop: start=0, step=1, limit=4
    $region2: #{tpu_custom_call.1} parent=1 // loop_pre_header
      _
    $region3: #{tpu_custom_call.1} parent=1 // loop_header
      %s12 = sphi 0, %s16
      %p13 = scmp.ge.s32.totalorder %s12, 4
      %s19 = sphi 0, %s31
      %s20 = sphi 0, %s27
      %s21 = sphi 0, %s19
      %s22 = sphi 0, %s20
      %s23 = sphi 0, %s21
      %s24 = sphi 0, %s22
      %s36 = sphi 0, %s38
      %s39 = sphi 0, %s36
      %s40 = sphi 0, %s39
      %s56 = sphi 0, %s40
      %s60 = sphi 0, %s60
      %s62 = sphi 0, %s60
      %s63 = sphi 0, %s62
      %s77 = sphi 0, %s63
      %s81 = sphi 0, %s81
      %s83 = sphi 0, %s81
      %s84 = sphi 0, %s83
      %s98 = sphi 0, %s84
      %s106 = sphi 0, %s108
      %s109 = sphi 0, %s106
      %s110 = sphi 0, %s109
      %s126 = sphi 0, %s110
    $region4: #{tpu_custom_call.1} parent=1 // loop_header_branch
      %15 = sbr.rel (%p13) target = $region8
    $region5: #{tpu_custom_call.1} parent=1 // loop_body
      %s17 = ssub.s32 %s12, 1
      %s18 = ssub.s32 %s12, 2
      %s25 = sadd.s32 1, %s20
      %p26 = scmp.ge.s32.totalorder %s25, 1
      %s27 = scalar_select %p26, 0, %s25
      %s28 = sadd.s32 1, %s19
      %s29 = scalar_select %p26, %s28, %s19
      %p30 = scmp.ge.s32.totalorder %s29, 2
      %s31 = scalar_select %p30, 0, %s29
      %s32 = ssub.s32 %s19, %s31
      %s33 = ssub.s32 %s20, %s27
      %s34 = sor.u32 %s32, %s33
      %p35 = scmp.eq.s32.totalorder %s34, 0
      %s37 = sadd.s32 %s36, 1
      %s38 = scalar_select %p35, %s36, %s37
      %p41 = pneg %p35
      %p42 = scmp.eq.s32.totalorder %s12, 1
      %p43 = por %p41, %p42
      %p44 = scmp.ne.s32.totalorder %s36, %s39
      %p45 = scmp.eq.s32.totalorder %s12, 0
      %p46 = por %p44, %p45
      %p47 = scmp.ne.s32.totalorder %s36, %s39
      %p48 = scmp.eq.s32.totalorder %s17, 1
      %p49 = por %p47, %p48
      %p50 = scmp.ne.s32.totalorder %s39, %s40
      %p51 = scmp.eq.s32.totalorder %s17, 0
      %p52 = por %p50, %p51
      %p53 = scmp.ne.s32.totalorder %s39, %s40
      %p54 = scmp.eq.s32.totalorder %s18, 1
      %p55 = por %p53, %p54
      %p57 = scmp.ne.s32.totalorder %s40, %s56
      %p58 = scmp.eq.s32.totalorder %s18, 0
      %p59 = por %p57, %p58
      %s61 = sadd.s32 %s60, 1
      %p64 = scmp.eq.s32.totalorder %s12, 1
      %p65 = scmp.ne.s32.totalorder %s60, %s62
      %p66 = scmp.eq.s32.totalorder %s12, 0
      %p67 = por %p65, %p66
      %p68 = scmp.ne.s32.totalorder %s60, %s62
      %p69 = scmp.eq.s32.totalorder %s17, 1
      %p70 = por %p68, %p69
      %p71 = scmp.ne.s32.totalorder %s62, %s63
      %p72 = scmp.eq.s32.totalorder %s17, 0
      %p73 = por %p71, %p72
      %p74 = scmp.ne.s32.totalorder %s62, %s63
      %p75 = scmp.eq.s32.totalorder %s18, 1
      %p76 = por %p74, %p75
      %p78 = scmp.ne.s32.totalorder %s63, %s77
      %p79 = scmp.eq.s32.totalorder %s18, 0
      %p80 = por %p78, %p79
      %s82 = sadd.s32 %s81, 1
      %p85 = scmp.eq.s32.totalorder %s12, 1
      %p86 = scmp.ne.s32.totalorder %s81, %s83
      %p87 = scmp.eq.s32.totalorder %s12, 0
      %p88 = por %p86, %p87
      %p89 = scmp.ne.s32.totalorder %s81, %s83
      %p90 = scmp.eq.s32.totalorder %s17, 1
      %p91 = por %p89, %p90
      %p92 = scmp.ne.s32.totalorder %s83, %s84
      %p93 = scmp.eq.s32.totalorder %s17, 0
      %p94 = por %p92, %p93
      %p95 = scmp.ne.s32.totalorder %s83, %s84
      %p96 = scmp.eq.s32.totalorder %s18, 1
      %p97 = por %p95, %p96
      %p99 = scmp.ne.s32.totalorder %s84, %s98
      %p100 = scmp.eq.s32.totalorder %s18, 0
      %p101 = por %p99, %p100
      %s102 = ssub.s32 %s19, %s31
      %s103 = ssub.s32 %s20, %s27
      %s104 = sor.u32 %s102, %s103
      %p105 = scmp.eq.s32.totalorder %s104, 0
      %s107 = sadd.s32 %s106, 1
      %s108 = scalar_select %p105, %s106, %s107
      %p111 = pneg %p105
      %p112 = scmp.eq.s32.totalorder %s12, 1
      %p113 = por %p111, %p112
      %p114 = scmp.ne.s32.totalorder %s106, %s109
      %p115 = scmp.eq.s32.totalorder %s12, 0
      %p116 = por %p114, %p115
      %p117 = scmp.ne.s32.totalorder %s106, %s109
      %p118 = scmp.eq.s32.totalorder %s17, 1
      %p119 = por %p117, %p118
      %p120 = scmp.ne.s32.totalorder %s109, %s110
      %p121 = scmp.eq.s32.totalorder %s17, 0
      %p122 = por %p120, %p121
      %p123 = scmp.ne.s32.totalorder %s109, %s110
      %p124 = scmp.eq.s32.totalorder %s18, 1
      %p125 = por %p123, %p124
      %p127 = scmp.ne.s32.totalorder %s110, %s126
      %p128 = scmp.eq.s32.totalorder %s18, 0
      %p129 = por %p127, %p128
      %p130 = scmp.le.s32.totalorder 1, %s12
      %p131 = scmp.lt.s32.totalorder %s12, 3
      %p132 = pnand %p130, %p131
      %p133 = pneg %p132
      // Predicated region
      $region9: #{tpu_custom_call.1} parent=5 // pred_check
        _
      $region10: #{tpu_custom_call.1} parent=5 // pred_check_branch
        %135 = sbr.rel (%p132) target = $region12
      $region11: #{tpu_custom_call.1} parent=5 // pred_region
        %s136 = ssub.s32 %s12, 1
        // Predicated region
        $region13: #{tpu_custom_call.1} parent=11 // pred_check
          %p137 = pneg %p73
        $region14: #{tpu_custom_call.1} parent=11 // pred_check_branch
          %139 = sbr.rel (%p137) target = $region16
        $region15: #{tpu_custom_call.1} parent=11 // pred_region
          _
        $region16: #{tpu_custom_call.1} parent=11 // pred_fallthru
          _
        // Predicated region
        $region17: #{tpu_custom_call.1} parent=11 // pred_check
          %p140 = pneg %p94
        $region18: #{tpu_custom_call.1} parent=11 // pred_check_branch
          %142 = sbr.rel (%p140) target = $region20
        $region19: #{tpu_custom_call.1} parent=11 // pred_region
          _
        $region20: #{tpu_custom_call.1} parent=11 // pred_fallthru
          _
      $region12: #{tpu_custom_call.1} parent=5 // pred_fallthru
        _
      %p143 = scmp.lt.s32.totalorder %s12, 2
      // Predicated region
      $region21: #{tpu_custom_call.1} parent=5 // pred_check
        %p144 = pneg %p143
      $region22: #{tpu_custom_call.1} parent=5 // pred_check_branch
        %146 = sbr.rel (%p144) target = $region24
      $region23: #{tpu_custom_call.1} parent=5 // pred_region
        // Predicated region
        $region25: #{tpu_custom_call.1} parent=23 // pred_check
          %p147 = pneg %p46
        $region26: #{tpu_custom_call.1} parent=23 // pred_check_branch
          %149 = sbr.rel (%p147) target = $region28
        $region27: #{tpu_custom_call.1} parent=23 // pred_region
          %s150 = smul.u32 2, %s20
          %p151 = scmp.lt.s32.totalorder %s19, 1
          %s152 = scalar_select %p151, %s19, 1
          %p153 = scmp.lt.s32.totalorder %s150, 1
          %s154 = scalar_select %p153, %s150, 1
          %s155 = smul.addr %s152, 26
          %s156 = sadd.s32 %s154, %s155
          %s157 = smul.addr %s156, 8
          %s158 = scalar_lea.vmem %s0, %s157
          %s159 = smul.u32 2, %s20
        $region28: #{tpu_custom_call.1} parent=23 // pred_fallthru
          _
      $region24: #{tpu_custom_call.1} parent=5 // pred_fallthru
        _
      %p160 = scmp.le.s32.totalorder 1, %s12
      %p161 = scmp.lt.s32.totalorder %s12, 3
      %p162 = pnand %p160, %p161
      %p163 = pneg %p162
      // Predicated region
      $region29: #{tpu_custom_call.1} parent=5 // pred_check
        _
      $region30: #{tpu_custom_call.1} parent=5 // pred_check_branch
        %165 = sbr.rel (%p162) target = $region32
      $region31: #{tpu_custom_call.1} parent=5 // pred_region
        %s166 = ssub.s32 %s12, 1
        %s167 = smul.u32 2, %s22
        %p168 = scmp.lt.s32.totalorder %s21, 1
        %s169 = scalar_select %p168, %s21, 1
        %p170 = scmp.lt.s32.totalorder %s167, 1
        %s171 = scalar_select %p170, %s167, 1
        %s172 = smul.addr %s169, 26
        %s173 = sadd.s32 %s171, %s172
        %s174 = smul.addr %s173, 8
        %s175 = scalar_lea.vmem %s0, %s174
        %p176 = pneg %p52
        %p177 = pneg %p49
        %p178 = pneg %p73
        %p179 = pneg %p70
        %p180 = pneg %p94
        %p181 = pneg %p91
        %p182 = pneg %p122
        %p183 = pneg %p119
        %s184 = sand.u32 %s109, 1
        %s185 = scalar_lea.sflag [#allocation3], %s184
        %s186 = sand.u32 %s109, 1
        %s187 = smul.addr %s186, 16
        %s188 = scalar_lea.vmem [#allocation2], %s187
        %s189 = smul.u32 2, %s22
        %p190 = scmp.lt.s32.totalorder %s21, 1
        %s191 = scalar_select %p190, %s21, 1
        %p192 = scmp.lt.s32.totalorder %s189, 1
        %s193 = scalar_select %p192, %s189, 1
        %s194 = smul.addr %s191, 26
        %s195 = sadd.s32 %s193, %s194
        %s196 = smul.addr %s195, 8
        %s197 = scalar_lea.vmem %s0, %s196
        %s198 = smul.u32 2, %s22
        %s199 = smul.u32 2, %s22
        %v200 = vld [vmem:[%s197] sm:$0xff]
        %v201 = vld [vmem:[%s197 + $0x8] sm:$0xff]
        %v202 = vld [vmem:[%s197 + $0x10] sm:$0xff]
        %v203 = vld [vmem:[%s197 + $0x18] sm:$0xff]
        %v204 = vld [vmem:[%s197 + $0x20] sm:$0xff]
        %v205 = vld [vmem:[%s197 + $0x28] sm:$0xff]
        %v206 = vld [vmem:[%s197 + $0x30] sm:$0xff]
        %v207 = vld [vmem:[%s197 + $0x38] sm:$0xff]
        %v208 = vld [vmem:[%s197 + $0x40] sm:$0xff]
        %v209 = vld [vmem:[%s197 + $0x48] sm:$0xff]
        %v210 = vld [vmem:[%s197 + $0x50] sm:$0xff]
        %v211 = vld [vmem:[%s197 + $0x58] sm:$0xff]
        %v212 = vld [vmem:[%s197 + $0x60] sm:$0xff]
        %v213 = vld [vmem:[%s197 + $0x68] sm:$0xff]
        %v214 = vld [vmem:[%s197 + $0x70] sm:$0xff]
        %v215 = vld [vmem:[%s197 + $0x78] sm:$0xff]
        %v216 = vld [vmem:[%s197 + $0x80] sm:$0xff]
        %v217 = vld [vmem:[%s197 + $0x88] sm:$0xff]
        %v218 = vld [vmem:[%s197 + $0x90] sm:$0xff]
        %v219 = vld [vmem:[%s197 + $0x98] sm:$0xff]
        %v220 = vld [vmem:[%s197 + $0xa0] sm:$0xff]
        %v221 = vld [vmem:[%s197 + $0xa8] sm:$0xff]
        %v222 = vld [vmem:[%s197 + $0xb0] sm:$0xff]
        %v223 = vld [vmem:[%s197 + $0xb8] sm:$0xff]
        %v224 = vld [vmem:[%s197 + $0xc0] sm:$0xf]
        %v225 = vld [vmem:[%s197 + $0xc8] sm:$0xf]
        %v226 = vmul.f32 %v200, -15.0
        %v227 = vmul.f32 %v201, -15.0
        %v228 = vmul.f32 %v202, -15.0
        %v229 = vmul.f32 %v203, -15.0
        %v230 = vmul.f32 %v204, -15.0
        %v231 = vmul.f32 %v205, -15.0
        %v232 = vmul.f32 %v206, -15.0
        %v233 = vmul.f32 %v207, -15.0
        %v234 = vmul.f32 %v208, -15.0
        %v235 = vmul.f32 %v209, -15.0
        %v236 = vmul.f32 %v210, -15.0
        %v237 = vmul.f32 %v211, -15.0
        %v238 = vmul.f32 %v212, -15.0
        %v239 = vmul.f32 %v213, -15.0
        %v240 = vmul.f32 %v214, -15.0
        %v241 = vmul.f32 %v215, -15.0
        %v242 = vmul.f32 %v216, -15.0
        %v243 = vmul.f32 %v217, -15.0
        %v244 = vmul.f32 %v218, -15.0
        %v245 = vmul.f32 %v219, -15.0
        %v246 = vmul.f32 %v220, -15.0
        %v247 = vmul.f32 %v221, -15.0
        %v248 = vmul.f32 %v222, -15.0
        %v249 = vmul.f32 %v223, -15.0
        %v250 = vmul.f32 %v224, -15.0
        %v251 = vmul.f32 %v225, -15.0
        %v252 = vmax.f32 %v226, %v230
        %v253 = vmax.f32 %v228, %v232
        %v254 = vmax.f32 %v252, %v234
        %v255 = vmax.f32 %v253, %v236
        %v256 = vmax.f32 %v254, %v238
        %v257 = vmax.f32 %v255, %v240
        %v258 = vmax.f32 %v256, %v242
        %v259 = vmax.f32 %v257, %v244
        %v260 = vmax.f32 %v258, %v246
        %v261 = vmax.f32 %v259, %v248
        %vm262 = vcmask 1043456
        %v263 = vsel %vm262, %v250, -inf
        %v264 = vmax.f32 %v260, %v263
        %v265 = vmax.f32 %v264, %v261
        %v266 = vrot.slane %v265, 4
        %v267 = vmax.f32 %v265, %v266
        %v268 = vrot.slane %v267, 2
        %v269 = vmax.f32 %v267, %v268
        %v270 = vrot.slane %v269, 1
        %v271 = vmax.f32 %v269, %v270
        %v272 = vmax.f32 %v227, %v231
        %v273 = vmax.f32 %v229, %v233
        %v274 = vmax.f32 %v272, %v235
        %v275 = vmax.f32 %v273, %v237
        %v276 = vmax.f32 %v274, %v239
        %v277 = vmax.f32 %v275, %v241
        %v278 = vmax.f32 %v276, %v243
        %v279 = vmax.f32 %v277, %v245
        %v280 = vmax.f32 %v278, %v247
        %v281 = vmax.f32 %v279, %v249
        %v282 = vsel %vm262, %v251, -inf
        %v283 = vmax.f32 %v280, %v282
        %v284 = vmax.f32 %v283, %v281
        %v285 = vrot.slane %v284, 4
        %v286 = vmax.f32 %v284, %v285
        %v287 = vrot.slane %v286, 2
        %v288 = vmax.f32 %v286, %v287
        %v289 = vrot.slane %v288, 1
        %v290 = vmax.f32 %v288, %v289
        %v291 = vsub.f32 %v226, %v271
        %v292 = vsub.f32 %v227, %v290
        %v293 = vsub.f32 %v228, %v271
        %v294 = vsub.f32 %v229, %v290
        %v295 = vsub.f32 %v230, %v271
        %v296 = vsub.f32 %v231, %v290
        %v297 = vsub.f32 %v232, %v271
        %v298 = vsub.f32 %v233, %v290
        %v299 = vsub.f32 %v234, %v271
        %v300 = vsub.f32 %v235, %v290
        %v301 = vsub.f32 %v236, %v271
        %v302 = vsub.f32 %v237, %v290
        %v303 = vsub.f32 %v238, %v271
        %v304 = vsub.f32 %v239, %v290
        %v305 = vsub.f32 %v240, %v271
        %v306 = vsub.f32 %v241, %v290
        %v307 = vsub.f32 %v242, %v271
        %v308 = vsub.f32 %v243, %v290
        %v309 = vsub.f32 %v244, %v271
        %v310 = vsub.f32 %v245, %v290
        %v311 = vsub.f32 %v246, %v271
        %v312 = vsub.f32 %v247, %v290
        %v313 = vsub.f32 %v248, %v271
        %v314 = vsub.f32 %v249, %v290
        %v315 = vsub.f32 %v250, %v271
        %v316 = vsub.f32 %v251, %v290
        %v317 = vmul.f32 %v291, 1.442695
        %v318 = vpow.pop %v317
        %v319 = vmul.f32 %v292, 1.442695
        %v320 = vpow.pop %v319
        %v321 = vmul.f32 %v293, 1.442695
        %v322 = vpow.pop %v321
        %v323 = vmul.f32 %v294, 1.442695
        %v324 = vpow.pop %v323
        %v325 = vmul.f32 %v295, 1.442695
        %v326 = vpow.pop %v325
        %v327 = vmul.f32 %v296, 1.442695
        %v328 = vpow.pop %v327
        %v329 = vmul.f32 %v297, 1.442695
        %v330 = vpow.pop %v329
        %v331 = vmul.f32 %v298, 1.442695
        %v332 = vpow.pop %v331
        %v333 = vmul.f32 %v299, 1.442695
        %v334 = vpow.pop %v333
        %v335 = vmul.f32 %v300, 1.442695
        %v336 = vpow.pop %v335
        %v337 = vmul.f32 %v301, 1.442695
        %v338 = vpow.pop %v337
        %v339 = vmul.f32 %v302, 1.442695
        %v340 = vpow.pop %v339
        %v341 = vmul.f32 %v303, 1.442695
        %v342 = vpow.pop %v341
        %v343 = vmul.f32 %v304, 1.442695
        %v344 = vpow.pop %v343
        %v345 = vmul.f32 %v305, 1.442695
        %v346 = vpow.pop %v345
        %v347 = vmul.f32 %v306, 1.442695
        %v348 = vpow.pop %v347
        %v349 = vmul.f32 %v307, 1.442695
        %v350 = vpow.pop %v349
        %v351 = vmul.f32 %v308, 1.442695
        %v352 = vpow.pop %v351
        %v353 = vmul.f32 %v309, 1.442695
        %v354 = vpow.pop %v353
        %v355 = vmul.f32 %v310, 1.442695
        %v356 = vpow.pop %v355
        %v357 = vmul.f32 %v311, 1.442695
        %v358 = vpow.pop %v357
        %v359 = vmul.f32 %v312, 1.442695
        %v360 = vpow.pop %v359
        %v361 = vmul.f32 %v313, 1.442695
        %v362 = vpow.pop %v361
        %v363 = vmul.f32 %v314, 1.442695
        %v364 = vpow.pop %v363
        %v365 = vmul.f32 %v315, 1.442695
        %v366 = vpow.pop %v365
        %v367 = vmul.f32 %v316, 1.442695
        %v368 = vpow.pop %v367
        %v369 = vld [vmem:[%s1] sm:$0xff]
        %vm370 = vcmask 818176
        %v372 = vsel %vm370, %v369, 0
        %v375 = vsel %vm262, %v366, 0
        %v378 = vsel %vm262, %v368, 0
        %380 = vmatpush.msra.mxu0 0.0
        %381 = vmatpush.msra.mxu0 0.0
        %382 = vmatpush.msra.mxu0 0.0
        %383 = vmatpush.msra.mxu0 %v375
        %384 = vmatpush.msra.mxu0 %v362
        %385 = vmatpush.msra.mxu0 %v358
        %386 = vmatpush.msra.mxu0 %v354
        %387 = vmatpush.msra.mxu0 %v350
        %388 = vmatpush.msra.mxu0 %v346
        %389 = vmatpush.msra.mxu0 %v342
        %390 = vmatpush.msra.mxu0 %v338
        %391 = vmatpush.msra.mxu0 %v334
        %392 = vmatpush.msra.mxu0 %v330
        %393 = vmatpush.msra.mxu0 %v326
        %394 = vmatpush.msra.mxu0 %v322
        %395 = vmatpush.msra.mxu0 %v318
        %396 = vmatmul.f32.gmra.mxu0 %v372
        %v397 = vpop.f32.mrf.mxu0
        %v398 = vadd.f32 0.0, %v397
        %399 = vdwg.mxu0
        %400 = vmatpush.msra.mxu0 0.0
        %401 = vmatpush.msra.mxu0 0.0
        %402 = vmatpush.msra.mxu0 0.0
        %403 = vmatpush.msra.mxu0 %v378
        %404 = vmatpush.msra.mxu0 %v364
        %405 = vmatpush.msra.mxu0 %v360
        %406 = vmatpush.msra.mxu0 %v356
        %407 = vmatpush.msra.mxu0 %v352
        %408 = vmatpush.msra.mxu0 %v348
        %409 = vmatpush.msra.mxu0 %v344
        %410 = vmatpush.msra.mxu0 %v340
        %411 = vmatpush.msra.mxu0 %v336
        %412 = vmatpush.msra.mxu0 %v332
        %413 = vmatpush.msra.mxu0 %v328
        %414 = vmatpush.msra.mxu0 %v324
        %415 = vmatpush.msra.mxu0 %v320
        %416 = vmatmul.f32.gmra.mxu0 %v372
        %v417 = vpop.f32.mrf.mxu0
        %v418 = vadd.f32 0.0, %v417
        %419 = vdwg.mxu0
        %v420 = vlog2.pop %v398
        %v421 = vmul.f32 %v420, 0.6931472
        %v422 = vlog2.pop %v418
        %v423 = vmul.f32 %v422, 0.6931472
        %v424 = vld [vmem:[%s2] sm:$0xff]
        %426 = vset.pattern.permute.xlu0 0
        %427 = vperm.xlu0 %426, %v424
        %v428 = vpop.permute.xlu0 %427
        %v430 = vadd.f32 %v421, %v428
        %v431 = vadd.f32 %v423, %v428
        %v432 = vadd.f32 %v430, %v271
        %v433 = vadd.f32 %v431, %v290
        %v434 = vmul.f32 %v432, 0.06666667
        %v435 = vmul.f32 %v433, 0.06666667
        %v436 = vsub.f32 0.0, %v434
        %v437 = vsub.f32 0.0, %v435
        %438 = vst [vmem:[%s188] sm:$0xff] %v436
        %439 = vst [vmem:[%s188 + $0x8] sm:$0xff] %v437
        %s440 = sand.u32 %s109, 1
        %s441 = scalar_lea.sflag [#allocation3], %s440
        %s442 = sand.u32 %s109, 1
        %s443 = smul.addr %s442, 16
        %s444 = scalar_lea.vmem [#allocation2], %s443
        // Predicated region
        $region33: #{tpu_custom_call.1} parent=31 // pred_check
          %p445 = pneg %p119
        $region34: #{tpu_custom_call.1} parent=31 // pred_check_branch
          %447 = sbr.rel (%p445) target = $region36
        $region35: #{tpu_custom_call.1} parent=31 // pred_region
          %s448 = smul.u32 2, %s22
          %450 = vsyncadd %s441, 0
          %s451 = smul.addr %s21, 2
          %s452 = sadd.s32 %s448, %s451
          %s453 = smul.addr %s452, 8
          %s454 = scalar_lea.hbm %s3, %s453
          %s456 = sshll.u32 %s444, 4
          %s457 = int_to_ptr.vmem [resolvable:$true] %s456
          %s458 = sshll.u32 %s454, 4
          %s459 = int_to_ptr.hbm [resolvable:$true] %s458
          %461 = dma.vmem_to_hbm [thread:$0]  %s457, 256, %s459, %s441
        $region36: #{tpu_custom_call.1} parent=31 // pred_fallthru
          _
      $region32: #{tpu_custom_call.1} parent=5 // pred_fallthru
        _
      %p462 = scmp.le.s32.totalorder 2, %s12
      // Predicated region
      $region37: #{tpu_custom_call.1} parent=5 // pred_check
        %p463 = pneg %p462
      $region38: #{tpu_custom_call.1} parent=5 // pred_check_branch
        %465 = sbr.rel (%p463) target = $region40
      $region39: #{tpu_custom_call.1} parent=5 // pred_region
        %s466 = ssub.s32 %s12, 2
        // Predicated region
        $region41: #{tpu_custom_call.1} parent=39 // pred_check
          %p467 = pneg %p125
        $region42: #{tpu_custom_call.1} parent=39 // pred_check_branch
          %469 = sbr.rel (%p467) target = $region44
        $region43: #{tpu_custom_call.1} parent=39 // pred_region
          %s470 = sand.u32 %s110, 1
          %s471 = scalar_lea.sflag [#allocation3], %s470
          %s472 = sand.u32 %s110, 1
          %s473 = smul.addr %s472, 16
          %s474 = scalar_lea.vmem [#allocation2], %s473
          %476 = dma.done %s471, 256
        $region44: #{tpu_custom_call.1} parent=39 // pred_fallthru
          _
      $region40: #{tpu_custom_call.1} parent=5 // pred_fallthru
        _
    $region6: #{tpu_custom_call.1} parent=1 // loop_footer
      %s16 = sadd.s32 1, %s12
    $region7: #{tpu_custom_call.1} parent=1 // loop_footer_branch
      %11 = sbr.rel target = $region3
    $region8: #{tpu_custom_call.1} parent=1 // loop_exit
      _
    %477 = vsyncpa [#allocation3], 1
    %s478 = scalar_lea.sflag [#allocation3], 1
    %479 = vsyncpa %s478, 1

</llo_original>
